<compile_context>
chip_gen: v6e
topology: v6e:2x2x1
jax: 0.10.0
libtpu: 0.0.40
codegen_flags: <defaults>
</compile_context>

<pallas_src>
import jax
import jax.numpy as jnp
from jax.experimental import pallas as pl
from jax.experimental.pallas import tpu as pltpu


# ----------------------------------------------------------------------------
# Pallas kernel: fused (matmul + bias + relu) x2, (matmul + bias), channels-first
# ----------------------------------------------------------------------------
def _lal_kernel(x_ref, w1_ref, b1_ref, w2_ref, b2_ref, w3_ref, b3_ref, o_ref):
    # x_ref: (Cin, tile_p) ; w*: (Cout, Cin/Cout) ; b*: (Cout, 1) ; o_ref: (Cout, tile_p)
    x = x_ref[...].astype(jnp.float32)

    h = jnp.dot(w1_ref[...], x, preferred_element_type=jnp.float32) + b1_ref[...]
    h = jnp.maximum(h, 0.0)

    h = jnp.dot(w2_ref[...], h, preferred_element_type=jnp.float32) + b2_ref[...]
    h = jnp.maximum(h, 0.0)

    h = jnp.dot(w3_ref[...], h, preferred_element_type=jnp.float32) + b3_ref[...]

    o_ref[...] = h.astype(o_ref.dtype)


def _lal_pallas(x_ncp, w1, b1, w2, b2, w3, b3, *, tile_p=512):
    """x_ncp: (N, Cin, P); w*: (Cout, Cin/Cout); b*: (Cout, 1). Returns (N, Cout, P)."""
    N, cin, P = x_ncp.shape
    cout = w1.shape[0]

    # Lane-dense pixel tile: multiple of 128 (or the full image when P <= 128).
    if P <= 128:
        tp = P                                  # full-extent block, always legal
    else:
        tp = max(128, min(tile_p, P))
        tp = (tp // 128) * 128                  # keep lane axis a multiple of 128
    grid = (N, pl.cdiv(P, tp))                  # boundary tile (if any) is masked by Pallas

    const = lambda n, p: (0, 0)                 # weights / biases: resident full block

    return pl.pallas_call(
        _lal_kernel,
        out_shape=jax.ShapeDtypeStruct((N, cout, P), x_ncp.dtype),
        grid_spec=pl.GridSpec(
            grid=grid,
            in_specs=[
                pl.BlockSpec((None, cin, tp), lambda n, p: (n, 0, p)),  # x tile
                pl.BlockSpec((cout, cin), const),                       # w1
                pl.BlockSpec((cout, 1), const),                         # b1
                pl.BlockSpec((cout, cout), const),                      # w2
                pl.BlockSpec((cout, 1), const),                         # b2
                pl.BlockSpec((cout, cout), const),                      # w3
                pl.BlockSpec((cout, 1), const),                         # b3
            ],
            out_specs=pl.BlockSpec((None, cout, tp), lambda n, p: (n, 0, p)),
        ),
        compiler_params=pltpu.CompilerParams(
            dimension_semantics=("parallel", "parallel"),
        ),
    )(x_ncp, w1, b1, w2, b2, w3, b3)


# ----------------------------------------------------------------------------
# Parameter setup (deterministic) + BN folding (glue, plain JAX)
# ----------------------------------------------------------------------------
def make_params(key, in_channels, out_channels):
    """Conv(1x1, bias) + BatchNorm params for the three stages."""
    params = {}
    keys = jax.random.split(key, 12)
    ki = iter(range(12))

    def conv_bn(cin, cout, prefix):
        w = jax.random.normal(keys[next(ki)], (cout, cin), jnp.float32) * 0.1
        b = jax.random.normal(keys[next(ki)], (cout,), jnp.float32) * 0.1
        gamma = 1.0 + 0.1 * jax.random.normal(keys[next(ki)], (cout,), jnp.float32)
        beta = 0.1 * jax.random.normal(keys[next(ki)], (cout,), jnp.float32)
        # deterministic "running" stats
        mean = jnp.linspace(-0.1, 0.1, cout, dtype=jnp.float32)
        var = jnp.linspace(0.5, 1.5, cout, dtype=jnp.float32)
        params[prefix] = dict(w=w, b=b, gamma=gamma, beta=beta, mean=mean, var=var)

    conv_bn(in_channels, out_channels, "c1")
    conv_bn(out_channels, out_channels, "c2")
    conv_bn(out_channels, out_channels, "c3")
    return params


def fold_conv_bn(p, eps=1e-5):
    """Fold 1x1-conv + eval-mode BN into (W_eff (Cout,Cin), b_eff (Cout,1))."""
    scale = p["gamma"] / jnp.sqrt(p["var"] + eps)          # (cout,)
    w_eff = p["w"] * scale[:, None]                        # (cout, cin)
    b_eff = (p["b"] - p["mean"]) * scale + p["beta"]       # (cout,)
    return w_eff, b_eff[:, None]


# ----------------------------------------------------------------------------
# Module forward (no transposes: NCHW stays channels-first end to end)
# ----------------------------------------------------------------------------
def location_adaptive_learner(x_nchw, params, nclass):
    N, Cin, H, W = x_nchw.shape
    w1, b1 = fold_conv_bn(params["c1"])
    w2, b2 = fold_conv_bn(params["c2"])
    w3, b3 = fold_conv_bn(params["c3"])
    Cout = w3.shape[0]

    x_ncp = x_nchw.reshape(N, Cin, H * W)          # free reshape (contiguous)
    y_ncp = _lal_pallas(x_ncp, w1, b1, w2, b2, w3, b3)
    y = y_ncp.reshape(N, Cout, H, W)               # already NCHW
    return y.reshape(N, nclass, Cout // nclass, H, W)


# ----------------------------------------------------------------------------
# Pure-JAX reference (same math, no Pallas) for a sanity check
# ----------------------------------------------------------------------------
def reference(x_nchw, params, nclass):
    N, Cin, H, W = x_nchw.shape
    w1, b1 = fold_conv_bn(params["c1"])
    w2, b2 = fold_conv_bn(params["c2"])
    w3, b3 = fold_conv_bn(params["c3"])
    x = x_nchw.reshape(N, Cin, H * W)
    h = jnp.maximum(jnp.einsum("oc,ncp->nop", w1, x) + b1[None], 0.0)
    h = jnp.maximum(jnp.einsum("oc,ncp->nop", w2, h) + b2[None], 0.0)
    h = jnp.einsum("oc,ncp->nop", w3, h) + b3[None]
    Cout = w3.shape[0]
    return h.reshape(N, Cout, H, W).reshape(N, nclass, Cout // nclass, H, W)


if __name__ == "__main__":
    nclass = 4
    in_channels = 16
    out_channels = 16  # view => (N, nclass, out_channels // nclass, H, W)
    N, H, W = 2, 16, 16

    key = jax.random.PRNGKey(0)
    kx, kp = jax.random.split(key)
    x = jax.random.normal(kx, (N, in_channels, H, W), jnp.float32)
    params = make_params(kp, in_channels, out_channels)

    y = jax.block_until_ready(location_adaptive_learner(x, params, nclass))

    y_ref = reference(x, params, nclass)
    assert y.shape == (N, nclass, out_channels // nclass, H, W), y.shape
    assert jnp.allclose(y, y_ref, atol=1e-5, rtol=1e-5), float(jnp.max(jnp.abs(y - y_ref)))

    print("KERNEL_OK")
</pallas_src>

<mosaic_0001>
module attributes {stable_mosaic.version = 11 : i64} {
  func.func @_lal_kernel(%arg0: i32, %arg1: i32, %arg2: memref<1x16x256xf32, #tpu.memory_space<vmem>>, %arg3: memref<16x16xf32, #tpu.memory_space<vmem>>, %arg4: memref<16x1xf32, #tpu.memory_space<vmem>>, %arg5: memref<16x16xf32, #tpu.memory_space<vmem>>, %arg6: memref<16x1xf32, #tpu.memory_space<vmem>>, %arg7: memref<16x16xf32, #tpu.memory_space<vmem>>, %arg8: memref<16x1xf32, #tpu.memory_space<vmem>>, %arg9: memref<1x16x256xf32, #tpu.memory_space<vmem>>) attributes {dimension_semantics = [#tpu.dimension_semantics<parallel>, #tpu.dimension_semantics<parallel>], iteration_bounds = array<i64: 2, 1>, scalar_prefetch = 0 : i64, scratch_operands = 0 : i64, tpu.core_type = #tpu.core_type<tc>, window_params = [{transform_indices = @transform_0, window_bounds = array<i64: 1, 16, 256>}, {pipeline_mode = #tpu.pipeline_mode<synchronous>, transform_indices = @transform_1, window_bounds = array<i64: 16, 16>}, {pipeline_mode = #tpu.pipeline_mode<synchronous>, transform_indices = @transform_2, window_bounds = array<i64: 16, 1>}, {pipeline_mode = #tpu.pipeline_mode<synchronous>, transform_indices = @transform_3, window_bounds = array<i64: 16, 16>}, {pipeline_mode = #tpu.pipeline_mode<synchronous>, transform_indices = @transform_4, window_bounds = array<i64: 16, 1>}, {pipeline_mode = #tpu.pipeline_mode<synchronous>, transform_indices = @transform_5, window_bounds = array<i64: 16, 16>}, {pipeline_mode = #tpu.pipeline_mode<synchronous>, transform_indices = @transform_6, window_bounds = array<i64: 16, 1>}, {transform_indices = @transform_7, window_bounds = array<i64: 1, 16, 256>}]} {
    %c0 = arith.constant 0 : index
    %c0_0 = arith.constant 0 : index
    %c0_1 = arith.constant 0 : index
    %0 = vector.load %arg2[%c0, %c0_0, %c0_1] : memref<1x16x256xf32, #tpu.memory_space<vmem>>, vector<1x16x256xf32>
    %1 = vector.shape_cast %0 : vector<1x16x256xf32> to vector<16x256xf32>
    %c0_2 = arith.constant 0 : index
    %c0_3 = arith.constant 0 : index
    %2 = vector.load %arg3[%c0_2, %c0_3] : memref<16x16xf32, #tpu.memory_space<vmem>>, vector<16x16xf32>
    %cst = arith.constant dense<0.000000e+00> : vector<16x256xf32>
    %3 = tpu.matmul %2, %1, %cst {dimension_numbers = #tpu.dot_dimension_numbers<[1], [0], [0], [1], [0, 0, 1, 1], [], []>} : vector<16x16xf32>, vector<16x256xf32>, vector<16x256xf32> -> vector<16x256xf32>
    %c0_4 = arith.constant 0 : index
    %c0_5 = arith.constant 0 : index
    %4 = vector.load %arg4[%c0_4, %c0_5] : memref<16x1xf32, #tpu.memory_space<vmem>>, vector<16x1xf32>
    %5 = vector.broadcast %4 : vector<16x1xf32> to vector<16x256xf32>
    %6 = arith.addf %3, %5 : vector<16x256xf32>
    %cst_6 = arith.constant 0.000000e+00 : f32
    %7 = vector.broadcast %cst_6 : f32 to vector<16x256xf32>
    %8 = arith.maximumf %6, %7 : vector<16x256xf32>
    %c0_7 = arith.constant 0 : index
    %c0_8 = arith.constant 0 : index
    %9 = vector.load %arg5[%c0_7, %c0_8] : memref<16x16xf32, #tpu.memory_space<vmem>>, vector<16x16xf32>
    %cst_9 = arith.constant dense<0.000000e+00> : vector<16x256xf32>
    %10 = tpu.matmul %9, %8, %cst_9 {dimension_numbers = #tpu.dot_dimension_numbers<[1], [0], [0], [1], [0, 0, 1, 1], [], []>} : vector<16x16xf32>, vector<16x256xf32>, vector<16x256xf32> -> vector<16x256xf32>
    %c0_10 = arith.constant 0 : index
    %c0_11 = arith.constant 0 : index
    %11 = vector.load %arg6[%c0_10, %c0_11] : memref<16x1xf32, #tpu.memory_space<vmem>>, vector<16x1xf32>
    %12 = vector.broadcast %11 : vector<16x1xf32> to vector<16x256xf32>
    %13 = arith.addf %10, %12 : vector<16x256xf32>
    %cst_12 = arith.constant 0.000000e+00 : f32
    %14 = vector.broadcast %cst_12 : f32 to vector<16x256xf32>
    %15 = arith.maximumf %13, %14 : vector<16x256xf32>
    %c0_13 = arith.constant 0 : index
    %c0_14 = arith.constant 0 : index
    %16 = vector.load %arg7[%c0_13, %c0_14] : memref<16x16xf32, #tpu.memory_space<vmem>>, vector<16x16xf32>
    %cst_15 = arith.constant dense<0.000000e+00> : vector<16x256xf32>
    %17 = tpu.matmul %16, %15, %cst_15 {dimension_numbers = #tpu.dot_dimension_numbers<[1], [0], [0], [1], [0, 0, 1, 1], [], []>} : vector<16x16xf32>, vector<16x256xf32>, vector<16x256xf32> -> vector<16x256xf32>
    %c0_16 = arith.constant 0 : index
    %c0_17 = arith.constant 0 : index
    %18 = vector.load %arg8[%c0_16, %c0_17] : memref<16x1xf32, #tpu.memory_space<vmem>>, vector<16x1xf32>
    %19 = vector.broadcast %18 : vector<16x1xf32> to vector<16x256xf32>
    %20 = arith.addf %17, %19 : vector<16x256xf32>
    %c0_18 = arith.constant 0 : index
    %c0_19 = arith.constant 0 : index
    %c0_20 = arith.constant 0 : index
    %21 = vector.load %arg9[%c0_18, %c0_19, %c0_20] : memref<1x16x256xf32, #tpu.memory_space<vmem>>, vector<1x16x256xf32>
    %22 = vector.shape_cast %21 : vector<1x16x256xf32> to vector<16x256xf32>
    %23 = vector.shape_cast %20 : vector<16x256xf32> to vector<1x16x256xf32>
    tpu.vector_store %arg9[%c0_18, %c0_19, %c0_20], %23 {strides = array<i32>} : memref<1x16x256xf32, #tpu.memory_space<vmem>>, vector<1x16x256xf32>,
    return
  }
  func.func @transform_0(%arg0: i32, %arg1: i32) -> (i32, i32, i32) {
    %c0_i32 = arith.constant 0 : i32
    %c0_i32_0 = arith.constant 0 : i32
    return %arg0, %c0_i32, %arg1 : i32, i32, i32
  }
  func.func @transform_1(%arg0: i32, %arg1: i32) -> (i32, i32) {
    %c0_i32 = arith.constant 0 : i32
    %c0_i32_0 = arith.constant 0 : i32
    %c0_i32_1 = arith.constant 0 : i32
    return %c0_i32, %c0_i32_0 : i32, i32
  }
  func.func @transform_2(%arg0: i32, %arg1: i32) -> (i32, i32) {
    %c0_i32 = arith.constant 0 : i32
    %c0_i32_0 = arith.constant 0 : i32
    %c0_i32_1 = arith.constant 0 : i32
    return %c0_i32, %c0_i32_0 : i32, i32
  }
  func.func @transform_3(%arg0: i32, %arg1: i32) -> (i32, i32) {
    %c0_i32 = arith.constant 0 : i32
    %c0_i32_0 = arith.constant 0 : i32
    %c0_i32_1 = arith.constant 0 : i32
    return %c0_i32, %c0_i32_0 : i32, i32
  }
  func.func @transform_4(%arg0: i32, %arg1: i32) -> (i32, i32) {
    %c0_i32 = arith.constant 0 : i32
    %c0_i32_0 = arith.constant 0 : i32
    %c0_i32_1 = arith.constant 0 : i32
    return %c0_i32, %c0_i32_0 : i32, i32
  }
  func.func @transform_5(%arg0: i32, %arg1: i32) -> (i32, i32) {
    %c0_i32 = arith.constant 0 : i32
    %c0_i32_0 = arith.constant 0 : i32
    %c0_i32_1 = arith.constant 0 : i32
    return %c0_i32, %c0_i32_0 : i32, i32
  }
  func.func @transform_6(%arg0: i32, %arg1: i32) -> (i32, i32) {
    %c0_i32 = arith.constant 0 : i32
    %c0_i32_0 = arith.constant 0 : i32
    %c0_i32_1 = arith.constant 0 : i32
    return %c0_i32, %c0_i32_0 : i32, i32
  }
  func.func @transform_7(%arg0: i32, %arg1: i32) -> (i32, i32, i32) {
    %c0_i32 = arith.constant 0 : i32
    %c0_i32_0 = arith.constant 0 : i32
    return %arg0, %c0_i32, %arg1 : i32, i32, i32
  }
}

</mosaic_0001>

<llo_original>
// kernel: tpu_custom_call.1
$region0: #{tpu_custom_call.1}
  #allocation0 [shape = 'u32[]', space=smem, size = 0x4, offset = 0x4, fixed_abs, tag = 'smem constant byte address 0x4 - core index']
  #allocation1 [shape = 'u32[144,128]{1,0:T(1,128)}', space=vmem, size = 0x12000, scoped, tag = 'internal scratch']
  %s0 = inlined_call_operand.hbm [shape: f32[2,16,256], index: 0, kind: input, shape index: {}]
  %s1 = inlined_call_operand.vmem [shape: f32[16,16], index: 1, kind: input, shape index: {}]
  %s2 = inlined_call_operand.vmem [shape: f32[16,1], index: 2, kind: input, shape index: {}]
  %s3 = inlined_call_operand.vmem [shape: f32[16,16], index: 3, kind: input, shape index: {}]
  %s4 = inlined_call_operand.vmem [shape: f32[16,1], index: 4, kind: input, shape index: {}]
  %s5 = inlined_call_operand.vmem [shape: f32[16,16], index: 5, kind: input, shape index: {}]
  %s6 = inlined_call_operand.vmem [shape: f32[16,1], index: 6, kind: input, shape index: {}]
  %s7 = inlined_call_operand.hbm [shape: f32[2,16,256], index: 7, kind: output, shape index: {}]
  %s8 = sld [smem:[#allocation0]]
  $region65: #{tpu_custom_call.1} parent=0
    _
  %s10 = ssub.s32 1, %s8
  %s11 = scalar_select 0, %s10, %s8
  $region1: #{tpu_custom_call.1} parent=0
    #allocation2 [shape = 'u8[32768]{0}', space=vmem, size = 0x8000, scoped, tag = 'input window, operand 0']
    #allocation3 [shape = 's32[2]{0}', space=sflag, size = 0x8, scoped, tag = 'scoped memory for tpu_custom_call.1']
    #allocation4 [shape = 's32[2]{0}', space=sflag, size = 0x8, scoped, tag = 'scoped memory for tpu_custom_call.1']
    #allocation5 [shape = 'u8[32768]{0}', space=vmem, size = 0x8000, scoped, tag = 'output window, operand 0']
    %12 = vsyncpa [#allocation3], 0
    %s13 = scalar_lea.sflag [#allocation3], 1
    %14 = vsyncpa %s13, 0
    %15 = vsyncpa [#allocation4], 0
    %s16 = scalar_lea.sflag [#allocation4], 1
    %17 = vsyncpa %s16, 0
    loop: start=0, step=1, limit=4
    $region2: #{tpu_custom_call.1} parent=1 // loop_pre_header
      _
    $region3: #{tpu_custom_call.1} parent=1 // loop_header
      %s19 = sphi 0, %s23
      %p20 = scmp.ge.s32.totalorder %s19, 4
      %s26 = sphi 0, %s38
      %s27 = sphi 0, %s34
      %s28 = sphi 0, %s26
      %s29 = sphi 0, %s27
      %s30 = sphi 0, %s28
      %s31 = sphi 0, %s29
      %s43 = sphi 0, %s45
      %s46 = sphi 0, %s43
      %s47 = sphi 0, %s46
      %s63 = sphi 0, %s47
      %s67 = sphi 0, %s67
      %s69 = sphi 0, %s67
      %s70 = sphi 0, %s69
      %s84 = sphi 0, %s70
      %s88 = sphi 0, %s88
      %s90 = sphi 0, %s88
      %s91 = sphi 0, %s90
      %s105 = sphi 0, %s91
      %s109 = sphi 0, %s109
      %s111 = sphi 0, %s109
      %s112 = sphi 0, %s111
      %s126 = sphi 0, %s112
      %s130 = sphi 0, %s130
      %s132 = sphi 0, %s130
      %s133 = sphi 0, %s132
      %s147 = sphi 0, %s133
      %s151 = sphi 0, %s151
      %s153 = sphi 0, %s151
      %s154 = sphi 0, %s153
      %s168 = sphi 0, %s154
      %s172 = sphi 0, %s172
      %s174 = sphi 0, %s172
      %s175 = sphi 0, %s174
      %s189 = sphi 0, %s175
      %s197 = sphi 0, %s199
      %s200 = sphi 0, %s197
      %s201 = sphi 0, %s200
      %s217 = sphi 0, %s201
    $region4: #{tpu_custom_call.1} parent=1 // loop_header_branch
      %22 = sbr.rel (%p20) target = $region8
    $region5: #{tpu_custom_call.1} parent=1 // loop_body
      %s24 = ssub.s32 %s19, 1
      %s25 = ssub.s32 %s19, 2
      %s32 = sadd.s32 1, %s27
      %p33 = scmp.ge.s32.totalorder %s32, 1
      %s34 = scalar_select %p33, 0, %s32
      %s35 = sadd.s32 1, %s26
      %s36 = scalar_select %p33, %s35, %s26
      %p37 = scmp.ge.s32.totalorder %s36, 2
      %s38 = scalar_select %p37, 0, %s36
      %s39 = ssub.s32 %s26, %s38
      %s40 = ssub.s32 %s27, %s34
      %s41 = sor.u32 %s39, %s40
      %p42 = scmp.eq.s32.totalorder %s41, 0
      %s44 = sadd.s32 %s43, 1
      %s45 = scalar_select %p42, %s43, %s44
      %p48 = pneg %p42
      %p49 = scmp.eq.s32.totalorder %s19, 1
      %p50 = por %p48, %p49
      %p51 = scmp.ne.s32.totalorder %s43, %s46
      %p52 = scmp.eq.s32.totalorder %s19, 0
      %p53 = por %p51, %p52
      %p54 = scmp.ne.s32.totalorder %s43, %s46
      %p55 = scmp.eq.s32.totalorder %s24, 1
      %p56 = por %p54, %p55
      %p57 = scmp.ne.s32.totalorder %s46, %s47
      %p58 = scmp.eq.s32.totalorder %s24, 0
      %p59 = por %p57, %p58
      %p60 = scmp.ne.s32.totalorder %s46, %s47
      %p61 = scmp.eq.s32.totalorder %s25, 1
      %p62 = por %p60, %p61
      %p64 = scmp.ne.s32.totalorder %s47, %s63
      %p65 = scmp.eq.s32.totalorder %s25, 0
      %p66 = por %p64, %p65
      %s68 = sadd.s32 %s67, 1
      %p71 = scmp.eq.s32.totalorder %s19, 1
      %p72 = scmp.ne.s32.totalorder %s67, %s69
      %p73 = scmp.eq.s32.totalorder %s19, 0
      %p74 = por %p72, %p73
      %p75 = scmp.ne.s32.totalorder %s67, %s69
      %p76 = scmp.eq.s32.totalorder %s24, 1
      %p77 = por %p75, %p76
      %p78 = scmp.ne.s32.totalorder %s69, %s70
      %p79 = scmp.eq.s32.totalorder %s24, 0
      %p80 = por %p78, %p79
      %p81 = scmp.ne.s32.totalorder %s69, %s70
      %p82 = scmp.eq.s32.totalorder %s25, 1
      %p83 = por %p81, %p82
      %p85 = scmp.ne.s32.totalorder %s70, %s84
      %p86 = scmp.eq.s32.totalorder %s25, 0
      %p87 = por %p85, %p86
      %s89 = sadd.s32 %s88, 1
      %p92 = scmp.eq.s32.totalorder %s19, 1
      %p93 = scmp.ne.s32.totalorder %s88, %s90
      %p94 = scmp.eq.s32.totalorder %s19, 0
      %p95 = por %p93, %p94
      %p96 = scmp.ne.s32.totalorder %s88, %s90
      %p97 = scmp.eq.s32.totalorder %s24, 1
      %p98 = por %p96, %p97
      %p99 = scmp.ne.s32.totalorder %s90, %s91
      %p100 = scmp.eq.s32.totalorder %s24, 0
      %p101 = por %p99, %p100
      %p102 = scmp.ne.s32.totalorder %s90, %s91
      %p103 = scmp.eq.s32.totalorder %s25, 1
      %p104 = por %p102, %p103
      %p106 = scmp.ne.s32.totalorder %s91, %s105
      %p107 = scmp.eq.s32.totalorder %s25, 0
      %p108 = por %p106, %p107
      %s110 = sadd.s32 %s109, 1
      %p113 = scmp.eq.s32.totalorder %s19, 1
      %p114 = scmp.ne.s32.totalorder %s109, %s111
      %p115 = scmp.eq.s32.totalorder %s19, 0
      %p116 = por %p114, %p115
      %p117 = scmp.ne.s32.totalorder %s109, %s111
      %p118 = scmp.eq.s32.totalorder %s24, 1
      %p119 = por %p117, %p118
      %p120 = scmp.ne.s32.totalorder %s111, %s112
      %p121 = scmp.eq.s32.totalorder %s24, 0
      %p122 = por %p120, %p121
      %p123 = scmp.ne.s32.totalorder %s111, %s112
      %p124 = scmp.eq.s32.totalorder %s25, 1
      %p125 = por %p123, %p124
      %p127 = scmp.ne.s32.totalorder %s112, %s126
      %p128 = scmp.eq.s32.totalorder %s25, 0
      %p129 = por %p127, %p128
      %s131 = sadd.s32 %s130, 1
      %p134 = scmp.eq.s32.totalorder %s19, 1
      %p135 = scmp.ne.s32.totalorder %s130, %s132
      %p136 = scmp.eq.s32.totalorder %s19, 0
      %p137 = por %p135, %p136
      %p138 = scmp.ne.s32.totalorder %s130, %s132
      %p139 = scmp.eq.s32.totalorder %s24, 1
      %p140 = por %p138, %p139
      %p141 = scmp.ne.s32.totalorder %s132, %s133
      %p142 = scmp.eq.s32.totalorder %s24, 0
      %p143 = por %p141, %p142
      %p144 = scmp.ne.s32.totalorder %s132, %s133
      %p145 = scmp.eq.s32.totalorder %s25, 1
      %p146 = por %p144, %p145
      %p148 = scmp.ne.s32.totalorder %s133, %s147
      %p149 = scmp.eq.s32.totalorder %s25, 0
      %p150 = por %p148, %p149
      %s152 = sadd.s32 %s151, 1
      %p155 = scmp.eq.s32.totalorder %s19, 1
      %p156 = scmp.ne.s32.totalorder %s151, %s153
      %p157 = scmp.eq.s32.totalorder %s19, 0
      %p158 = por %p156, %p157
      %p159 = scmp.ne.s32.totalorder %s151, %s153
      %p160 = scmp.eq.s32.totalorder %s24, 1
      %p161 = por %p159, %p160
      %p162 = scmp.ne.s32.totalorder %s153, %s154
      %p163 = scmp.eq.s32.totalorder %s24, 0
      %p164 = por %p162, %p163
      %p165 = scmp.ne.s32.totalorder %s153, %s154
      %p166 = scmp.eq.s32.totalorder %s25, 1
      %p167 = por %p165, %p166
      %p169 = scmp.ne.s32.totalorder %s154, %s168
      %p170 = scmp.eq.s32.totalorder %s25, 0
      %p171 = por %p169, %p170
      %s173 = sadd.s32 %s172, 1
      %p176 = scmp.eq.s32.totalorder %s19, 1
      %p177 = scmp.ne.s32.totalorder %s172, %s174
      %p178 = scmp.eq.s32.totalorder %s19, 0
      %p179 = por %p177, %p178
      %p180 = scmp.ne.s32.totalorder %s172, %s174
      %p181 = scmp.eq.s32.totalorder %s24, 1
      %p182 = por %p180, %p181
      %p183 = scmp.ne.s32.totalorder %s174, %s175
      %p184 = scmp.eq.s32.totalorder %s24, 0
      %p185 = por %p183, %p184
      %p186 = scmp.ne.s32.totalorder %s174, %s175
      %p187 = scmp.eq.s32.totalorder %s25, 1
      %p188 = por %p186, %p187
      %p190 = scmp.ne.s32.totalorder %s175, %s189
      %p191 = scmp.eq.s32.totalorder %s25, 0
      %p192 = por %p190, %p191
      %s193 = ssub.s32 %s26, %s38
      %s194 = ssub.s32 %s27, %s34
      %s195 = sor.u32 %s193, %s194
      %p196 = scmp.eq.s32.totalorder %s195, 0
      %s198 = sadd.s32 %s197, 1
      %s199 = scalar_select %p196, %s197, %s198
      %p202 = pneg %p196
      %p203 = scmp.eq.s32.totalorder %s19, 1
      %p204 = por %p202, %p203
      %p205 = scmp.ne.s32.totalorder %s197, %s200
      %p206 = scmp.eq.s32.totalorder %s19, 0
      %p207 = por %p205, %p206
      %p208 = scmp.ne.s32.totalorder %s197, %s200
      %p209 = scmp.eq.s32.totalorder %s24, 1
      %p210 = por %p208, %p209
      %p211 = scmp.ne.s32.totalorder %s200, %s201
      %p212 = scmp.eq.s32.totalorder %s24, 0
      %p213 = por %p211, %p212
      %p214 = scmp.ne.s32.totalorder %s200, %s201
      %p215 = scmp.eq.s32.totalorder %s25, 1
      %p216 = por %p214, %p215
      %p218 = scmp.ne.s32.totalorder %s201, %s217
      %p219 = scmp.eq.s32.totalorder %s25, 0
      %p220 = por %p218, %p219
      %p221 = scmp.le.s32.totalorder 1, %s19
      %p222 = scmp.lt.s32.totalorder %s19, 3
      %p223 = pnand %p221, %p222
      %p224 = pneg %p223
      // Predicated region
      $region9: #{tpu_custom_call.1} parent=5 // pred_check
        _
      $region10: #{tpu_custom_call.1} parent=5 // pred_check_branch
        %226 = sbr.rel (%p223) target = $region12
      $region11: #{tpu_custom_call.1} parent=5 // pred_region
        %s227 = ssub.s32 %s19, 1
        // Predicated region
        $region13: #{tpu_custom_call.1} parent=11 // pred_check
          %p228 = pneg %p80
        $region14: #{tpu_custom_call.1} parent=11 // pred_check_branch
          %230 = sbr.rel (%p228) target = $region16
        $region15: #{tpu_custom_call.1} parent=11 // pred_region
          _
        $region16: #{tpu_custom_call.1} parent=11 // pred_fallthru
          _
        // Predicated region
        $region17: #{tpu_custom_call.1} parent=11 // pred_check
          %p231 = pneg %p101
        $region18: #{tpu_custom_call.1} parent=11 // pred_check_branch
          %233 = sbr.rel (%p231) target = $region20
        $region19: #{tpu_custom_call.1} parent=11 // pred_region
          _
        $region20: #{tpu_custom_call.1} parent=11 // pred_fallthru
          _
        // Predicated region
        $region21: #{tpu_custom_call.1} parent=11 // pred_check
          %p234 = pneg %p122
        $region22: #{tpu_custom_call.1} parent=11 // pred_check_branch
          %236 = sbr.rel (%p234) target = $region24
        $region23: #{tpu_custom_call.1} parent=11 // pred_region
          _
        $region24: #{tpu_custom_call.1} parent=11 // pred_fallthru
          _
        // Predicated region
        $region25: #{tpu_custom_call.1} parent=11 // pred_check
          %p237 = pneg %p143
        $region26: #{tpu_custom_call.1} parent=11 // pred_check_branch
          %239 = sbr.rel (%p237) target = $region28
        $region27: #{tpu_custom_call.1} parent=11 // pred_region
          _
        $region28: #{tpu_custom_call.1} parent=11 // pred_fallthru
          _
        // Predicated region
        $region29: #{tpu_custom_call.1} parent=11 // pred_check
          %p240 = pneg %p164
        $region30: #{tpu_custom_call.1} parent=11 // pred_check_branch
          %242 = sbr.rel (%p240) target = $region32
        $region31: #{tpu_custom_call.1} parent=11 // pred_region
          _
        $region32: #{tpu_custom_call.1} parent=11 // pred_fallthru
          _
        // Predicated region
        $region33: #{tpu_custom_call.1} parent=11 // pred_check
          %p243 = pneg %p185
        $region34: #{tpu_custom_call.1} parent=11 // pred_check_branch
          %245 = sbr.rel (%p243) target = $region36
        $region35: #{tpu_custom_call.1} parent=11 // pred_region
          _
        $region36: #{tpu_custom_call.1} parent=11 // pred_fallthru
          _
      $region12: #{tpu_custom_call.1} parent=5 // pred_fallthru
        _
      %p246 = scmp.lt.s32.totalorder %s19, 2
      // Predicated region
      $region37: #{tpu_custom_call.1} parent=5 // pred_check
        %p247 = pneg %p246
      $region38: #{tpu_custom_call.1} parent=5 // pred_check_branch
        %249 = sbr.rel (%p247) target = $region40
      $region39: #{tpu_custom_call.1} parent=5 // pred_region
        // Predicated region
        $region41: #{tpu_custom_call.1} parent=39 // pred_check
          %p250 = pneg %p53
        $region42: #{tpu_custom_call.1} parent=39 // pred_check_branch
          %252 = sbr.rel (%p250) target = $region44
        $region43: #{tpu_custom_call.1} parent=39 // pred_region
          %s253 = sand.u32 %s43, 1
          %s254 = scalar_lea.sflag [#allocation3], %s253
          %s255 = sand.u32 %s43, 1
          %s256 = smul.addr %s255, 32
          %s257 = scalar_lea.vmem [#allocation2], %s256
          %s258 = smul.u32 2, %s27
          %s260 = ssub.s32 512, 512
          %261 = vsyncadd %s254, %s260
          %s262 = smul.addr %s26, 4
          %s263 = sadd.s32 %s258, %s262
          %s264 = smul.addr %s263, 128
          %s265 = scalar_lea.hbm %s0, %s264
          %s266 = sshll.u32 %s257, 4
          %s267 = int_to_ptr.vmem [resolvable:$true] %s266
          %272 = dma.hbm_to_vmem [thread:$0]  %s265, 512, %s267, %s254, 256, 256, 16
        $region44: #{tpu_custom_call.1} parent=39 // pred_fallthru
          _
      $region40: #{tpu_custom_call.1} parent=5 // pred_fallthru
        _
      %p273 = scmp.le.s32.totalorder 1, %s19
      %p274 = scmp.lt.s32.totalorder %s19, 3
      %p275 = pnand %p273, %p274
      %p276 = pneg %p275
      // Predicated region
      $region45: #{tpu_custom_call.1} parent=5 // pred_check
        _
      $region46: #{tpu_custom_call.1} parent=5 // pred_check_branch
        %278 = sbr.rel (%p275) target = $region48
      $region47: #{tpu_custom_call.1} parent=5 // pred_region
        %s279 = ssub.s32 %s19, 1
        %s280 = sand.u32 %s46, 1
        %s281 = scalar_lea.sflag [#allocation3], %s280
        %s282 = sand.u32 %s46, 1
        %s283 = smul.addr %s282, 32
        %s284 = scalar_lea.vmem [#allocation2], %s283
        // Predicated region
        $region49: #{tpu_custom_call.1} parent=47 // pred_check
          %p285 = pneg %p59
        $region50: #{tpu_custom_call.1} parent=47 // pred_check_branch
          %287 = sbr.rel (%p285) target = $region52
        $region51: #{tpu_custom_call.1} parent=47 // pred_region
          %288 = dma.done %s281, 512
        $region52: #{tpu_custom_call.1} parent=47 // pred_fallthru
          _
        %s289 = sand.u32 %s46, 1
        %s290 = scalar_lea.sflag [#allocation3], %s289
        %s291 = sand.u32 %s46, 1
        %s292 = smul.addr %s291, 32
        %s293 = scalar_lea.vmem [#allocation2], %s292
        %p294 = pneg %p59
        %p295 = pneg %p56
        %p296 = pneg %p80
        %p297 = pneg %p77
        %p298 = pneg %p101
        %p299 = pneg %p98
        %p300 = pneg %p122
        %p301 = pneg %p119
        %p302 = pneg %p143
        %p303 = pneg %p140
        %p304 = pneg %p164
        %p305 = pneg %p161
        %p306 = pneg %p185
        %p307 = pneg %p182
        %p308 = pneg %p213
        %p309 = pneg %p210
        %s310 = sand.u32 %s200, 1
        %s311 = scalar_lea.sflag [#allocation4], %s310
        %s312 = sand.u32 %s200, 1
        %s313 = smul.addr %s312, 32
        %s314 = scalar_lea.vmem [#allocation5], %s313
        %s315 = smul.u32 2, %s29
        %s316 = smul.u32 2, %s29
        %v317 = vld [vmem:[%s284] sm:$0xff]
        %v318 = vld [vmem:[%s284 + $0x8] sm:$0xff]
        %v319 = vld [vmem:[%s284 + $0x10] sm:$0xff]
        %v320 = vld [vmem:[%s284 + $0x18] sm:$0xff]
        %v321 = vld [vmem:[%s1] sm:$0xff]
        %v322 = vld [vmem:[%s1 + $0x8] sm:$0xff]
        %v323 = vld [vmem:[%s2] sm:$0xff]
        %v324 = vld [vmem:[%s2 + $0x8] sm:$0xff]
        %326 = vset.pattern.permute.xlu0 0
        %327 = vperm.xlu0 %326, %v323
        %v328 = vpop.permute.xlu0 %327
        %331 = vset.pattern.permute.xlu0 0
        %332 = vperm.xlu0 %331, %v324
        %v333 = vpop.permute.xlu0 %332
        %vm335 = vcmask 130048
        %v337 = vsel %vm335, %v321, 0
        %v340 = vsel %vm335, %v322, 0
        %342 = vmatprep.subr.mxu0 0.0
        %343 = vmatpush1.msra.mxu0 0.0
        %344 = vmatprep.subr.mxu0 0.0
        %345 = vmatpush1.msra.mxu0 0.0
        %346 = vmatprep.subr.mxu0 0.0
        %347 = vmatpush1.msra.mxu0 0.0
        %348 = vmatprep.subr.mxu0 0.0
        %349 = vmatpush1.msra.mxu0 0.0
        %350 = vmatprep.subr.mxu0 0.0
        %351 = vmatpush1.msra.mxu0 0.0
        %352 = vmatprep.subr.mxu0 0.0
        %353 = vmatpush1.msra.mxu0 0.0
        %354 = vmatprep.subr.mxu0 0.0
        %355 = vmatpush1.msra.mxu0 0.0
        %356 = vmatprep.subr.mxu0 0.0
        %357 = vmatpush1.msra.mxu0 0.0
        %358 = vmatprep.subr.mxu0 0.0
        %359 = vmatpush1.msra.mxu0 0.0
        %360 = vmatprep.subr.mxu0 0.0
        %361 = vmatpush1.msra.mxu0 0.0
        %362 = vmatprep.subr.mxu0 0.0
        %363 = vmatpush1.msra.mxu0 0.0
        %364 = vmatprep.subr.mxu0 0.0
        %365 = vmatpush1.msra.mxu0 0.0
        %366 = vmatprep.subr.mxu0 0.0
        %367 = vmatpush1.msra.mxu0 0.0
        %368 = vmatprep.subr.mxu0 0.0
        %369 = vmatpush1.msra.mxu0 0.0
        %370 = vmatprep.subr.mxu0 %v320
        %371 = vmatpush1.msra.mxu0 %v319
        %372 = vmatprep.subr.mxu0 %v318
        %373 = vmatpush1.msra.mxu0 %v317
        %374 = vmatprep.subr.mxu0 0.0
        %375 = vmatpush2.msra.mxu0 0.0
        %376 = vmatprep.subr.mxu0 0.0
        %377 = vmatpush2.msra.mxu0 0.0
        %378 = vmatprep.subr.mxu0 0.0
        %379 = vmatpush2.msra.mxu0 0.0
        %380 = vmatprep.subr.mxu0 0.0
        %381 = vmatpush2.msra.mxu0 0.0
        %382 = vmatprep.subr.mxu0 0.0
        %383 = vmatpush2.msra.mxu0 0.0
        %384 = vmatprep.subr.mxu0 0.0
        %385 = vmatpush2.msra.mxu0 0.0
        %386 = vmatprep.subr.mxu0 0.0
        %387 = vmatpush2.msra.mxu0 0.0
        %388 = vmatprep.subr.mxu0 0.0
        %389 = vmatpush2.msra.mxu0 0.0
        %390 = vmatprep.subr.mxu0 0.0
        %391 = vmatpush2.msra.mxu0 0.0
        %392 = vmatprep.subr.mxu0 0.0
        %393 = vmatpush2.msra.mxu0 0.0
        %394 = vmatprep.subr.mxu0 0.0
        %395 = vmatpush2.msra.mxu0 0.0
        %396 = vmatprep.subr.mxu0 0.0
        %397 = vmatpush2.msra.mxu0 0.0
        %398 = vmatprep.subr.mxu0 0.0
        %399 = vmatpush2.msra.mxu0 0.0
        %400 = vmatprep.subr.mxu0 0.0
        %401 = vmatpush2.msra.mxu0 0.0
        %402 = vmatprep.subr.mxu0 0.0
        %403 = vmatpush2.msra.mxu0 0.0
        %404 = vmatprep.subr.mxu0 0.0
        %405 = vmatpush2.msra.mxu0 0.0
        %406 = vmatprep.mubr.f32.mxu0 0.0
        %407 = vmatmul.mubr.f32.gmra.mxu0 %v337
        %v408 = vpop.f32.mrf.mxu0
        %v409 = vadd.f32 %v328, %v408
        %v410 = vpop.f32.mrf.mxu0
        %v411 = vadd.f32 %v328, %v410
        %412 = vmatprep.mubr.f32.mxu0 0.0
        %413 = vmatmul.mubr.f32.gmra.mxu0 %v340
        %v414 = vpop.f32.mrf.mxu0
        %v415 = vadd.f32 %v333, %v414
        %v416 = vpop.f32.mrf.mxu0
        %v417 = vadd.f32 %v333, %v416
        %418 = vdwg.mxu0
        %v419 = vmax.f32 %v409, 0.0
        %v420 = vmax.f32 %v411, 0.0
        %v421 = vmax.f32 %v415, 0.0
        %v422 = vmax.f32 %v417, 0.0
        %v423 = vld [vmem:[%s3] sm:$0xff]
        %v424 = vld [vmem:[%s3 + $0x8] sm:$0xff]
        %v425 = vld [vmem:[%s4] sm:$0xff]
        %v426 = vld [vmem:[%s4 + $0x8] sm:$0xff]
        %428 = vset.pattern.permute.xlu0 0
        %429 = vperm.xlu0 %428, %v425
        %v430 = vpop.permute.xlu0 %429
        %433 = vset.pattern.permute.xlu0 0
        %434 = vperm.xlu0 %433, %v426
        %v435 = vpop.permute.xlu0 %434
        %v438 = vsel %vm335, %v423, 0
        %v441 = vsel %vm335, %v424, 0
        %443 = vmatprep.subr.mxu0 0.0
        %444 = vmatpush1.msra.mxu0 0.0
        %445 = vmatprep.subr.mxu0 0.0
        %446 = vmatpush1.msra.mxu0 0.0
        %447 = vmatprep.subr.mxu0 0.0
        %448 = vmatpush1.msra.mxu0 0.0
        %449 = vmatprep.subr.mxu0 0.0
        %450 = vmatpush1.msra.mxu0 0.0
        %451 = vmatprep.subr.mxu0 0.0
        %452 = vmatpush1.msra.mxu0 0.0
        %453 = vmatprep.subr.mxu0 0.0
        %454 = vmatpush1.msra.mxu0 0.0
        %455 = vmatprep.subr.mxu0 0.0
        %456 = vmatpush1.msra.mxu0 0.0
        %457 = vmatprep.subr.mxu0 0.0
        %458 = vmatpush1.msra.mxu0 0.0
        %459 = vmatprep.subr.mxu0 0.0
        %460 = vmatpush1.msra.mxu0 0.0
        %461 = vmatprep.subr.mxu0 0.0
        %462 = vmatpush1.msra.mxu0 0.0
        %463 = vmatprep.subr.mxu0 0.0
        %464 = vmatpush1.msra.mxu0 0.0
        %465 = vmatprep.subr.mxu0 0.0
        %466 = vmatpush1.msra.mxu0 0.0
        %467 = vmatprep.subr.mxu0 0.0
        %468 = vmatpush1.msra.mxu0 0.0
        %469 = vmatprep.subr.mxu0 0.0
        %470 = vmatpush1.msra.mxu0 0.0
        %471 = vmatprep.subr.mxu0 %v422
        %472 = vmatpush1.msra.mxu0 %v421
        %473 = vmatprep.subr.mxu0 %v420
        %474 = vmatpush1.msra.mxu0 %v419
        %475 = vmatprep.subr.mxu0 0.0
        %476 = vmatpush2.msra.mxu0 0.0
        %477 = vmatprep.subr.mxu0 0.0
        %478 = vmatpush2.msra.mxu0 0.0
        %479 = vmatprep.subr.mxu0 0.0
        %480 = vmatpush2.msra.mxu0 0.0
        %481 = vmatprep.subr.mxu0 0.0
        %482 = vmatpush2.msra.mxu0 0.0
        %483 = vmatprep.subr.mxu0 0.0
        %484 = vmatpush2.msra.mxu0 0.0
        %485 = vmatprep.subr.mxu0 0.0
        %486 = vmatpush2.msra.mxu0 0.0
        %487 = vmatprep.subr.mxu0 0.0
        %488 = vmatpush2.msra.mxu0 0.0
        %489 = vmatprep.subr.mxu0 0.0
        %490 = vmatpush2.msra.mxu0 0.0
        %491 = vmatprep.subr.mxu0 0.0
        %492 = vmatpush2.msra.mxu0 0.0
        %493 = vmatprep.subr.mxu0 0.0
        %494 = vmatpush2.msra.mxu0 0.0
        %495 = vmatprep.subr.mxu0 0.0
        %496 = vmatpush2.msra.mxu0 0.0
        %497 = vmatprep.subr.mxu0 0.0
        %498 = vmatpush2.msra.mxu0 0.0
        %499 = vmatprep.subr.mxu0 0.0
        %500 = vmatpush2.msra.mxu0 0.0
        %501 = vmatprep.subr.mxu0 0.0
        %502 = vmatpush2.msra.mxu0 0.0
        %503 = vmatprep.subr.mxu0 0.0
        %504 = vmatpush2.msra.mxu0 0.0
        %505 = vmatprep.subr.mxu0 0.0
        %506 = vmatpush2.msra.mxu0 0.0
        %507 = vmatprep.mubr.f32.mxu0 0.0
        %508 = vmatmul.mubr.f32.gmra.mxu0 %v438
        %v509 = vpop.f32.mrf.mxu0
        %v510 = vadd.f32 %v430, %v509
        %v511 = vpop.f32.mrf.mxu0
        %v512 = vadd.f32 %v430, %v511
        %513 = vmatprep.mubr.f32.mxu0 0.0
        %514 = vmatmul.mubr.f32.gmra.mxu0 %v441
        %v515 = vpop.f32.mrf.mxu0
        %v516 = vadd.f32 %v435, %v515
        %v517 = vpop.f32.mrf.mxu0
        %v518 = vadd.f32 %v435, %v517
        %519 = vdwg.mxu0
        %v520 = vmax.f32 %v510, 0.0
        %v521 = vmax.f32 %v512, 0.0
        %v522 = vmax.f32 %v516, 0.0
        %v523 = vmax.f32 %v518, 0.0
        %v524 = vld [vmem:[%s5] sm:$0xff]
        %v525 = vld [vmem:[%s5 + $0x8] sm:$0xff]
        %v526 = vld [vmem:[%s6] sm:$0xff]
        %v527 = vld [vmem:[%s6 + $0x8] sm:$0xff]
        %529 = vset.pattern.permute.xlu0 0
        %530 = vperm.xlu0 %529, %v526
        %v531 = vpop.permute.xlu0 %530
        %534 = vset.pattern.permute.xlu0 0
        %535 = vperm.xlu0 %534, %v527
        %v536 = vpop.permute.xlu0 %535
        %v539 = vsel %vm335, %v524, 0
        %v542 = vsel %vm335, %v525, 0
        %544 = vmatprep.subr.mxu0 0.0
        %545 = vmatpush1.msra.mxu0 0.0
        %546 = vmatprep.subr.mxu0 0.0
        %547 = vmatpush1.msra.mxu0 0.0
        %548 = vmatprep.subr.mxu0 0.0
        %549 = vmatpush1.msra.mxu0 0.0
        %550 = vmatprep.subr.mxu0 0.0
        %551 = vmatpush1.msra.mxu0 0.0
        %552 = vmatprep.subr.mxu0 0.0
        %553 = vmatpush1.msra.mxu0 0.0
        %554 = vmatprep.subr.mxu0 0.0
        %555 = vmatpush1.msra.mxu0 0.0
        %556 = vmatprep.subr.mxu0 0.0
        %557 = vmatpush1.msra.mxu0 0.0
        %558 = vmatprep.subr.mxu0 0.0
        %559 = vmatpush1.msra.mxu0 0.0
        %560 = vmatprep.subr.mxu0 0.0
        %561 = vmatpush1.msra.mxu0 0.0
        %562 = vmatprep.subr.mxu0 0.0
        %563 = vmatpush1.msra.mxu0 0.0
        %564 = vmatprep.subr.mxu0 0.0
        %565 = vmatpush1.msra.mxu0 0.0
        %566 = vmatprep.subr.mxu0 0.0
        %567 = vmatpush1.msra.mxu0 0.0
        %568 = vmatprep.subr.mxu0 0.0
        %569 = vmatpush1.msra.mxu0 0.0
        %570 = vmatprep.subr.mxu0 0.0
        %571 = vmatpush1.msra.mxu0 0.0
        %572 = vmatprep.subr.mxu0 %v523
        %573 = vmatpush1.msra.mxu0 %v522
        %574 = vmatprep.subr.mxu0 %v521
        %575 = vmatpush1.msra.mxu0 %v520
        %576 = vmatprep.subr.mxu0 0.0
        %577 = vmatpush2.msra.mxu0 0.0
        %578 = vmatprep.subr.mxu0 0.0
        %579 = vmatpush2.msra.mxu0 0.0
        %580 = vmatprep.subr.mxu0 0.0
        %581 = vmatpush2.msra.mxu0 0.0
        %582 = vmatprep.subr.mxu0 0.0
        %583 = vmatpush2.msra.mxu0 0.0
        %584 = vmatprep.subr.mxu0 0.0
        %585 = vmatpush2.msra.mxu0 0.0
        %586 = vmatprep.subr.mxu0 0.0
        %587 = vmatpush2.msra.mxu0 0.0
        %588 = vmatprep.subr.mxu0 0.0
        %589 = vmatpush2.msra.mxu0 0.0
        %590 = vmatprep.subr.mxu0 0.0
        %591 = vmatpush2.msra.mxu0 0.0
        %592 = vmatprep.subr.mxu0 0.0
        %593 = vmatpush2.msra.mxu0 0.0
        %594 = vmatprep.subr.mxu0 0.0
        %595 = vmatpush2.msra.mxu0 0.0
        %596 = vmatprep.subr.mxu0 0.0
        %597 = vmatpush2.msra.mxu0 0.0
        %598 = vmatprep.subr.mxu0 0.0
        %599 = vmatpush2.msra.mxu0 0.0
        %600 = vmatprep.subr.mxu0 0.0
        %601 = vmatpush2.msra.mxu0 0.0
        %602 = vmatprep.subr.mxu0 0.0
        %603 = vmatpush2.msra.mxu0 0.0
        %604 = vmatprep.subr.mxu0 0.0
        %605 = vmatpush2.msra.mxu0 0.0
        %606 = vmatprep.subr.mxu0 0.0
        %607 = vmatpush2.msra.mxu0 0.0
        %608 = vmatprep.mubr.f32.mxu0 0.0
        %609 = vmatmul.mubr.f32.gmra.mxu0 %v539
        %v610 = vpop.f32.mrf.mxu0
        %v611 = vadd.f32 %v531, %v610
        %v612 = vpop.f32.mrf.mxu0
        %v613 = vadd.f32 %v531, %v612
        %614 = vmatprep.mubr.f32.mxu0 0.0
        %615 = vmatmul.mubr.f32.gmra.mxu0 %v542
        %v616 = vpop.f32.mrf.mxu0
        %v617 = vadd.f32 %v536, %v616
        %v618 = vpop.f32.mrf.mxu0
        %v619 = vadd.f32 %v536, %v618
        %620 = vdwg.mxu0
        %621 = vst [vmem:[%s314] sm:$0xff] %v611
        %622 = vst [vmem:[%s314 + $0x8] sm:$0xff] %v613
        %623 = vst [vmem:[%s314 + $0x10] sm:$0xff] %v617
        %624 = vst [vmem:[%s314 + $0x18] sm:$0xff] %v619
        %s625 = sand.u32 %s200, 1
        %s626 = scalar_lea.sflag [#allocation4], %s625
        %s627 = sand.u32 %s200, 1
        %s628 = smul.addr %s627, 32
        %s629 = scalar_lea.vmem [#allocation5], %s628
        // Predicated region
        $region53: #{tpu_custom_call.1} parent=47 // pred_check
          %p630 = pneg %p210
        $region54: #{tpu_custom_call.1} parent=47 // pred_check_branch
          %632 = sbr.rel (%p630) target = $region56
        $region55: #{tpu_custom_call.1} parent=47 // pred_region
          %s633 = smul.u32 2, %s29
          %s635 = ssub.s32 512, 512
          %636 = vsyncadd %s626, %s635
          %s637 = smul.addr %s28, 4
          %s638 = sadd.s32 %s633, %s637
          %s639 = smul.addr %s638, 128
          %s640 = scalar_lea.hbm %s7, %s639
          %s641 = sshll.u32 %s629, 4
          %s642 = int_to_ptr.vmem [resolvable:$true] %s641
          %647 = dma.vmem_to_hbm [thread:$0]  %s642, 512, %s640, %s626, 256, 256, 16
        $region56: #{tpu_custom_call.1} parent=47 // pred_fallthru
          _
      $region48: #{tpu_custom_call.1} parent=5 // pred_fallthru
        _
      %p648 = scmp.le.s32.totalorder 2, %s19
      // Predicated region
      $region57: #{tpu_custom_call.1} parent=5 // pred_check
        %p649 = pneg %p648
      $region58: #{tpu_custom_call.1} parent=5 // pred_check_branch
        %651 = sbr.rel (%p649) target = $region60
      $region59: #{tpu_custom_call.1} parent=5 // pred_region
        %s652 = ssub.s32 %s19, 2
        // Predicated region
        $region61: #{tpu_custom_call.1} parent=59 // pred_check
          %p653 = pneg %p216
        $region62: #{tpu_custom_call.1} parent=59 // pred_check_branch
          %655 = sbr.rel (%p653) target = $region64
        $region63: #{tpu_custom_call.1} parent=59 // pred_region
          %s656 = sand.u32 %s201, 1
          %s657 = scalar_lea.sflag [#allocation4], %s656
          %s658 = sand.u32 %s201, 1
          %s659 = smul.addr %s658, 32
          %s660 = scalar_lea.vmem [#allocation5], %s659
          %661 = dma.done %s657, 512
        $region64: #{tpu_custom_call.1} parent=59 // pred_fallthru
          _
      $region60: #{tpu_custom_call.1} parent=5 // pred_fallthru
        _
    $region6: #{tpu_custom_call.1} parent=1 // loop_footer
      %s23 = sadd.s32 1, %s19
    $region7: #{tpu_custom_call.1} parent=1 // loop_footer_branch
      %18 = sbr.rel target = $region3
    $region8: #{tpu_custom_call.1} parent=1 // loop_exit
      _
    %662 = vsyncpa [#allocation3], 1
    %s663 = scalar_lea.sflag [#allocation3], 1
    %664 = vsyncpa %s663, 1
    %665 = vsyncpa [#allocation4], 1
    %s666 = scalar_lea.sflag [#allocation4], 1
    %667 = vsyncpa %s666, 1

</llo_original>
